<compile_context>
chip_gen: v7x
topology: tpu7x:2x2x1
jax: 0.10.0
libtpu: 0.0.40
codegen_flags: <defaults>
</compile_context>

<pallas_src>
import math
from functools import partial

import jax
import jax.numpy as jnp
from jax import lax
from jax.experimental import pallas as pl
from jax.experimental.pallas import tpu as pltpu


# ---------------------------------------------------------------------------
# Block-size / VMEM heuristics
# ---------------------------------------------------------------------------
def _vmem_budget_bytes():
    """~70% of physical VMEM (falls back to v7x's 64 MiB if query fails)."""
    cap = 64 * 1024 * 1024
    try:
        info = pltpu.get_tpu_info()
        cap = int(getattr(info, "vmem_capacity_bytes", cap)) or cap
    except Exception:
        pass
    return max(16 * 1024 * 1024, int(cap * 0.7))


def _pick_block_b(B, L, HE, itemsize, budget, max_bt=16):
    """Batch rows per grid step.

    As large as the VMEM budget allows (double-buffered in/out blocks plus the
    doubled scratch), while keeping >= 2 grid steps when B >= 2 so the
    'parallel' axis can shard across two TensorCores, preferring an even step
    count for load balance on dual-TC chips.
    """
    fixed = 2 * L * max(HE * itemsize, 4 * L)          # doubled VMEM scratch
    per_b = 4 * L * HE * itemsize + 8 * L              # dbl-buffered in + out
    cap = max(1, (budget - fixed) // max(per_b, 1))
    cap = min(cap, max_bt)
    divisors = [d for d in range(1, B + 1) if B % d == 0]
    valid = [d for d in divisors if d <= cap and (B < 2 or B // d >= 2)]
    if not valid:
        return 1
    best = max(valid)
    even = [d for d in valid if (B // d) % 2 == 0]
    if even and max(even) * 2 >= best:                 # don't over-shrink for evenness
        best = max(even)
    return best


# ---------------------------------------------------------------------------
# Kernel 1: mean over (head, channel) of circular cross-correlation
#   mean[b, tau] = (1/HE) * sum_{t, r} q[b, t, r] * k[b, (t - tau) mod L, r]
# MXU Gram matmul + circulant diagonal sums of the (L, L) Gram matrix.
# ---------------------------------------------------------------------------
def _corr_mean_kernel(q_ref, k_ref, mean_ref, gg_ref, *, L, HE, Bt):
    inv_he = jnp.float32(1.0 / HE)
    for b in range(Bt):                               # Bt is small & static
        qb = q_ref[b]                                 # (L, HE) input dtype
        kb = k_ref[b]                                 # (L, HE) input dtype
        # MXU: Gram matrix over the head*channel axis, f32 accumulation.
        g = lax.dot_general(qb, kb, (((1,), (1,)), ((), ())),
                            preferred_element_type=jnp.float32)      # (L, L)
        # Row-doubled copy so circulant diagonals become static slices.
        gg_ref[0:L, :] = g
        gg_ref[L:2 * L, :] = g
        # corr[tau] = sum_u G[(u + tau) mod L, u] = sum_u GG[u + tau, u]
        acc = jnp.zeros((L, 1), jnp.float32)
        for u in range(L):                            # static unroll, O(L^2) adds
            acc = acc + gg_ref[u:u + L, u:u + 1]
        mean_ref[b] = acc * inv_he
    # TODO(synk): a strided XLU roll (per-lane sublane shift) would fuse the L
    # static column slices into one op; kept explicit for lowering robustness
    # at arbitrary (non-128-aligned) L.
    # TODO(synk): for small L (<128) two batch rows could be stacked into one
    # LHS to better fill the 256x256 MXU on v6e/v7x.


def _correlation_mean_pallas(q, k, Bt, vmem_limit):
    B, L, HE = q.shape
    kernel = partial(_corr_mean_kernel, L=L, HE=HE, Bt=Bt)
    mean = pl.pallas_call(
        kernel,
        out_shape=jax.ShapeDtypeStruct((B, L, 1), jnp.float32),
        grid_spec=pltpu.PrefetchScalarGridSpec(
            num_scalar_prefetch=0,
            grid=(B // Bt,),
            in_specs=[pl.BlockSpec((Bt, L, HE), lambda i: (i, 0, 0)),
                      pl.BlockSpec((Bt, L, HE), lambda i: (i, 0, 0))],
            out_specs=pl.BlockSpec((Bt, L, 1), lambda i: (i, 0, 0)),
            scratch_shapes=[pltpu.VMEM((2 * L, L), jnp.float32)]),
        compiler_params=pltpu.CompilerParams(
            dimension_semantics=("parallel",),
            vmem_limit_bytes=vmem_limit),
    )(q, k)
    return mean[:, :, 0]                               # (B, L) f32


# ---------------------------------------------------------------------------
# Kernel 2: time-delay aggregation ('speed', training path)
#   out[b, t, :] = sum_i w[b, i] * v[b, (t + tao[i]) mod L, :]
# Chunked over output rows so the f32 accumulator stays resident in vregs.
# ---------------------------------------------------------------------------
def _agg_kernel(tao_ref, w_ref, v_ref, o_ref, vv_ref, *, L, HE, Bt, K_TOP, CT):
    b0 = pl.program_id(0) * Bt
    # Static chunk schedule (handles a ragged tail when CT does not divide L).
    chunks = []
    start = 0
    while start < L:
        chunks.append((start, min(CT, L - start)))
        start += chunks[-1][1]
    for b in range(Bt):
        vb = v_ref[b]                                  # (L, HE) input dtype
        vv_ref[0:L, :] = vb                            # doubled copy: circular
        vv_ref[L:2 * L, :] = vb                        # roll -> one dynamic slice
        # TODO(synk): the doubled copy could be removed with a dynamic sublane
        # roll of the loaded block; kept for lowering robustness.
        for (r0, ct) in chunks:
            acc = jnp.zeros((ct, HE), jnp.float32)
            for i in range(K_TOP):                     # K_TOP = int(log L): tiny
                shift = tao_ref[i]                     # delay (SMEM, prefetch)
                wi = w_ref[(b0 + b) * K_TOP + i]       # per-batch weight (SMEM)
                rolled = vv_ref[pl.ds(r0 + shift, ct), :]   # v[(t + tao_i) % L]
                acc = acc + rolled.astype(jnp.float32) * wi
            o_ref[b, r0:r0 + ct, :] = acc.astype(o_ref.dtype)


def _time_delay_agg_pallas(tao, w_flat, v, Bt, vmem_limit):
    B, L, HE = v.shape
    K_TOP = tao.shape[0]
    # ~64 KiB f32 accumulator chunk (stays in vregs; no full-tile spills).
    CT = min(L, max(8, 16384 // max(HE, 1)))
    kernel = partial(_agg_kernel, L=L, HE=HE, Bt=Bt, K_TOP=K_TOP, CT=CT)
    out = pl.pallas_call(
        kernel,
        out_shape=jax.ShapeDtypeStruct((B, L, HE), v.dtype),
        grid_spec=pltpu.PrefetchScalarGridSpec(
            num_scalar_prefetch=1,                     # tao -> SMEM
            grid=(B // Bt,),
            in_specs=[pl.BlockSpec(memory_space=pltpu.MemorySpace.SMEM),  # w (B*k,)
                      pl.BlockSpec((Bt, L, HE), lambda i, tao_ref: (i, 0, 0))],
            out_specs=pl.BlockSpec((Bt, L, HE), lambda i, tao_ref: (i, 0, 0)),
            scratch_shapes=[pltpu.VMEM((2 * L, HE), v.dtype)]),
        compiler_params=pltpu.CompilerParams(
            dimension_semantics=("parallel",),
            vmem_limit_bytes=vmem_limit),
    )(tao, w_flat, v)
    return out


# ---------------------------------------------------------------------------
# Full forward (glue: reshape, top-k over a length-L vector, softmax)
# ---------------------------------------------------------------------------
@partial(jax.jit, static_argnames=("factor",))
def autocorrelation_forward(queries, keys, values, attn_mask=None, *, factor=1):
    # inputs: [B, L, H, E] exactly like the torch module's forward signature
    B, Q, H, E = queries.shape
    V = values.shape[1]
    if Q > V:
        zeros = jnp.zeros((B, Q - V, H, E), values.dtype)
        values = jnp.concatenate([values, zeros], axis=1)
        keys = jnp.concatenate([keys, jnp.zeros((B, Q - V, H, E), keys.dtype)],
                               axis=1)
    else:
        values = values[:, :Q]
        keys = keys[:, :Q]
    L = Q
    HE = H * E

    budget = _vmem_budget_bytes()
    itemsize = jnp.dtype(values.dtype).itemsize
    Bt = _pick_block_b(B, L, HE, itemsize, budget)

    # [B, L, H, E] -> [B, L, H*E]  (pure reshape; lane axis = H*E).
    # No dtype up-cast: kernels DMA the input dtype and accumulate in f32.
    q = queries.reshape(B, L, HE)
    k = keys.reshape(B, L, HE)
    v = values.reshape(B, L, HE)

    mean_rqk = _correlation_mean_pallas(q, k, Bt, budget)            # (B, L) f32

    k_top = max(1, min(int(factor * math.log(L)), L))                # clamp [1, L]
    # training-phase 'speed' aggregation: delays shared across the batch
    tao = lax.top_k(jnp.mean(mean_rqk, axis=0), k_top)[1].astype(jnp.int32)
    r_qk_top = jnp.take(mean_rqk, tao, axis=-1)                      # (B, k_top)
    w = jax.nn.softmax(r_qk_top, axis=-1).astype(jnp.float32)        # (B, k_top)

    out = _time_delay_agg_pallas(tao, w.reshape(-1), v, Bt, budget)  # (B, L, HE)
    out = out.reshape(B, L, H, E)
    # TODO(synk): inference-mode 'speed' (per-batch top-k delays), the other
    # agg_modes, norm=True and attn_mask are not wired up; module defaults
    # only (training=True, agg_mode='speed', norm=False, output_attention=False).
    return out, None


# ---------------------------------------------------------------------------
# Pure-JAX reference (uses FFT, mirrors the torch code) for validation
# ---------------------------------------------------------------------------
def _reference_forward(queries, keys, values, factor=1):
    B, Q, H, E = queries.shape
    values = values[:, :Q]
    keys = keys[:, :Q]
    q = jnp.transpose(queries, (0, 2, 3, 1)).astype(jnp.float32)
    k = jnp.transpose(keys, (0, 2, 3, 1)).astype(jnp.float32)
    v = jnp.transpose(values, (0, 2, 3, 1)).astype(jnp.float32)
    qf = jnp.fft.rfft(q, axis=-1)
    kf = jnp.fft.rfft(k, axis=-1)
    corr = jnp.fft.irfft(qf * jnp.conj(kf), n=Q, axis=-1)
    k_top = max(1, min(int(factor * math.log(Q)), Q))
    mean_r = corr.mean(axis=1).mean(axis=1)                          # (B, L)
    tao = lax.top_k(jnp.mean(mean_r, axis=0), k_top)[1]
    r_top = jnp.take(mean_r, tao, axis=-1)
    w = jax.nn.softmax(r_top, axis=-1)
    agg = jnp.zeros_like(v)
    for i in range(k_top):
        rolled = jnp.roll(v, -int(tao[i]), axis=-1)
        agg = agg + rolled * w[:, i][:, None, None, None]
    return jnp.transpose(agg, (0, 3, 1, 2)), mean_r


if __name__ == "__main__":
    key = jax.random.PRNGKey(0)
    kq, kk_, kv = jax.random.split(key, 3)
    B, L, H, E = 2, 16, 4, 8
    queries = jax.random.normal(kq, (B, L, H, E), jnp.float32)
    keys = jax.random.normal(kk_, (B, L, H, E), jnp.float32)
    values = jax.random.normal(kv, (B, L, H, E), jnp.float32)

    out, attn = autocorrelation_forward(queries, keys, values, None)
    out = jax.block_until_ready(out)
    assert out.shape == (B, L, H, E)
    assert attn is None

    HE = H * E
    budget = _vmem_budget_bytes()
    Bt = _pick_block_b(B, L, HE, 4, budget)
    q2 = queries.reshape(B, L, HE)
    k2 = keys.reshape(B, L, HE)
    v2 = values.reshape(B, L, HE)

    # Check 1: kernel-1 circular correlation mean vs the FFT reference.
    ref_out, ref_mean = _reference_forward(queries, keys, values)
    mean_k = _correlation_mean_pallas(q2, k2, Bt, budget)
    mean_k = jax.block_until_ready(mean_k)
    err_mean = float(jnp.max(jnp.abs(mean_k - ref_mean)))
    assert err_mean < 2e-2, f"corr-mean max abs err {err_mean}"

    # Check 2: end-to-end output vs a pure-JAX aggregation driven by the
    # kernel's own correlation (validates kernel 2 + glue, independent of
    # MXU-precision-induced top-k ties).
    k_top = max(1, min(int(math.log(L)), L))
    tao = lax.top_k(jnp.mean(mean_k, axis=0), k_top)[1]
    w = jax.nn.softmax(jnp.take(mean_k, tao, axis=-1), axis=-1)
    exp = jnp.zeros_like(v2)
    for i in range(k_top):
        exp = exp + jnp.roll(v2, -int(tao[i]), axis=1) * w[:, i][:, None, None]
    err_out = float(jnp.max(jnp.abs(out.reshape(B, L, HE) - exp)))
    assert err_out < 1e-3, f"aggregation max abs err {err_out}"

    # Check 3 (loose): full pipeline vs the FFT reference when both picked the
    # same top-k delays (they virtually always do).
    ref_tao = lax.top_k(jnp.mean(ref_mean, axis=0), k_top)[1]
    if set(map(int, tao.tolist())) == set(map(int, ref_tao.tolist())):
        err_e2e = float(jnp.max(jnp.abs(out - ref_out)))
        assert err_e2e < 1e-2, f"end-to-end max abs err {err_e2e}"

    print("KERNEL_OK")
</pallas_src>

<mosaic_0001>
module attributes {stable_mosaic.version = 11 : i64} {
  func.func @_corr_mean_kernel(%arg0: i32, %arg1: memref<1x16x32xf32, #tpu.memory_space<vmem>>, %arg2: memref<1x16x32xf32, #tpu.memory_space<vmem>>, %arg3: memref<1x16x1xf32, #tpu.memory_space<vmem>>, %arg4: memref<32x16xf32, #tpu.memory_space<vmem>>) attributes {dimension_semantics = [#tpu.dimension_semantics<parallel>], iteration_bounds = array<i64: 2>, scalar_prefetch = 0 : i64, scratch_operands = 1 : i64, tpu.core_type = #tpu.core_type<tc>, window_params = [{transform_indices = @transform_0, window_bounds = array<i64: 1, 16, 32>}, {transform_indices = @transform_1, window_bounds = array<i64: 1, 16, 32>}, {transform_indices = @transform_2, window_bounds = array<i64: 1, 16, 1>}]} {
    %c0 = arith.constant 0 : index
    %c0_0 = arith.constant 0 : index
    %c0_1 = arith.constant 0 : index
    %0 = vector.load %arg1[%c0, %c0_0, %c0_1] : memref<1x16x32xf32, #tpu.memory_space<vmem>>, vector<1x16x32xf32>
    %1 = vector.shape_cast %0 : vector<1x16x32xf32> to vector<16x32xf32>
    %c0_2 = arith.constant 0 : index
    %c0_3 = arith.constant 0 : index
    %c0_4 = arith.constant 0 : index
    %2 = vector.load %arg2[%c0_2, %c0_3, %c0_4] : memref<1x16x32xf32, #tpu.memory_space<vmem>>, vector<1x16x32xf32>
    %3 = vector.shape_cast %2 : vector<1x16x32xf32> to vector<16x32xf32>
    %cst = arith.constant dense<0.000000e+00> : vector<16x16xf32>
    %4 = tpu.matmul %1, %3, %cst {dimension_numbers = #tpu.dot_dimension_numbers<[1], [1], [0], [0], [0, 0, 1, 0], [], []>} : vector<16x32xf32>, vector<16x32xf32>, vector<16x16xf32> -> vector<16x16xf32>
    %c0_5 = arith.constant 0 : index
    %c0_6 = arith.constant 0 : index
    %5 = vector.load %arg4[%c0_5, %c0_6] : memref<32x16xf32, #tpu.memory_space<vmem>>, vector<16x16xf32>
    tpu.vector_store %arg4[%c0_5, %c0_6], %4 {strides = array<i32>} : memref<32x16xf32, #tpu.memory_space<vmem>>, vector<16x16xf32>,
    %c16 = arith.constant 16 : index
    %c0_7 = arith.constant 0 : index
    %6 = vector.load %arg4[%c16, %c0_7] : memref<32x16xf32, #tpu.memory_space<vmem>>, vector<16x16xf32>
    tpu.vector_store %arg4[%c16, %c0_7], %4 {strides = array<i32>} : memref<32x16xf32, #tpu.memory_space<vmem>>, vector<16x16xf32>,
    %cst_8 = arith.constant 0.000000e+00 : f32
    %7 = vector.broadcast %cst_8 : f32 to vector<16x1xf32>
    %c0_9 = arith.constant 0 : index
    %c0_10 = arith.constant 0 : index
    %8 = vector.load %arg4[%c0_9, %c0_10] : memref<32x16xf32, #tpu.memory_space<vmem>>, vector<16x1xf32>
    %9 = arith.addf %7, %8 : vector<16x1xf32>
    %c1 = arith.constant 1 : index
    %c1_11 = arith.constant 1 : index
    %10 = vector.load %arg4[%c1, %c1_11] : memref<32x16xf32, #tpu.memory_space<vmem>>, vector<16x1xf32>
    %11 = arith.addf %9, %10 : vector<16x1xf32>
    %c2 = arith.constant 2 : index
    %c2_12 = arith.constant 2 : index
    %12 = vector.load %arg4[%c2, %c2_12] : memref<32x16xf32, #tpu.memory_space<vmem>>, vector<16x1xf32>
    %13 = arith.addf %11, %12 : vector<16x1xf32>
    %c3 = arith.constant 3 : index
    %c3_13 = arith.constant 3 : index
    %14 = vector.load %arg4[%c3, %c3_13] : memref<32x16xf32, #tpu.memory_space<vmem>>, vector<16x1xf32>
    %15 = arith.addf %13, %14 : vector<16x1xf32>
    %c4 = arith.constant 4 : index
    %c4_14 = arith.constant 4 : index
    %16 = vector.load %arg4[%c4, %c4_14] : memref<32x16xf32, #tpu.memory_space<vmem>>, vector<16x1xf32>
    %17 = arith.addf %15, %16 : vector<16x1xf32>
    %c5 = arith.constant 5 : index
    %c5_15 = arith.constant 5 : index
    %18 = vector.load %arg4[%c5, %c5_15] : memref<32x16xf32, #tpu.memory_space<vmem>>, vector<16x1xf32>
    %19 = arith.addf %17, %18 : vector<16x1xf32>
    %c6 = arith.constant 6 : index
    %c6_16 = arith.constant 6 : index
    %20 = vector.load %arg4[%c6, %c6_16] : memref<32x16xf32, #tpu.memory_space<vmem>>, vector<16x1xf32>
    %21 = arith.addf %19, %20 : vector<16x1xf32>
    %c7 = arith.constant 7 : index
    %c7_17 = arith.constant 7 : index
    %22 = vector.load %arg4[%c7, %c7_17] : memref<32x16xf32, #tpu.memory_space<vmem>>, vector<16x1xf32>
    %23 = arith.addf %21, %22 : vector<16x1xf32>
    %c8 = arith.constant 8 : index
    %c8_18 = arith.constant 8 : index
    %24 = vector.load %arg4[%c8, %c8_18] : memref<32x16xf32, #tpu.memory_space<vmem>>, vector<16x1xf32>
    %25 = arith.addf %23, %24 : vector<16x1xf32>
    %c9 = arith.constant 9 : index
    %c9_19 = arith.constant 9 : index
    %26 = vector.load %arg4[%c9, %c9_19] : memref<32x16xf32, #tpu.memory_space<vmem>>, vector<16x1xf32>
    %27 = arith.addf %25, %26 : vector<16x1xf32>
    %c10 = arith.constant 10 : index
    %c10_20 = arith.constant 10 : index
    %28 = vector.load %arg4[%c10, %c10_20] : memref<32x16xf32, #tpu.memory_space<vmem>>, vector<16x1xf32>
    %29 = arith.addf %27, %28 : vector<16x1xf32>
    %c11 = arith.constant 11 : index
    %c11_21 = arith.constant 11 : index
    %30 = vector.load %arg4[%c11, %c11_21] : memref<32x16xf32, #tpu.memory_space<vmem>>, vector<16x1xf32>
    %31 = arith.addf %29, %30 : vector<16x1xf32>
    %c12 = arith.constant 12 : index
    %c12_22 = arith.constant 12 : index
    %32 = vector.load %arg4[%c12, %c12_22] : memref<32x16xf32, #tpu.memory_space<vmem>>, vector<16x1xf32>
    %33 = arith.addf %31, %32 : vector<16x1xf32>
    %c13 = arith.constant 13 : index
    %c13_23 = arith.constant 13 : index
    %34 = vector.load %arg4[%c13, %c13_23] : memref<32x16xf32, #tpu.memory_space<vmem>>, vector<16x1xf32>
    %35 = arith.addf %33, %34 : vector<16x1xf32>
    %c14 = arith.constant 14 : index
    %c14_24 = arith.constant 14 : index
    %36 = vector.load %arg4[%c14, %c14_24] : memref<32x16xf32, #tpu.memory_space<vmem>>, vector<16x1xf32>
    %37 = arith.addf %35, %36 : vector<16x1xf32>
    %c15 = arith.constant 15 : index
    %c15_25 = arith.constant 15 : index
    %38 = vector.load %arg4[%c15, %c15_25] : memref<32x16xf32, #tpu.memory_space<vmem>>, vector<16x1xf32>
    %39 = arith.addf %37, %38 : vector<16x1xf32>
    %cst_26 = arith.constant 3.125000e-02 : f32
    %40 = vector.broadcast %cst_26 : f32 to vector<16x1xf32>
    %41 = arith.mulf %39, %40 : vector<16x1xf32>
    %c0_27 = arith.constant 0 : index
    %c0_28 = arith.constant 0 : index
    %c0_29 = arith.constant 0 : index
    %42 = vector.load %arg3[%c0_27, %c0_28, %c0_29] : memref<1x16x1xf32, #tpu.memory_space<vmem>>, vector<1x16x1xf32>
    %43 = vector.shape_cast %42 : vector<1x16x1xf32> to vector<16x1xf32>
    %44 = vector.shape_cast %41 : vector<16x1xf32> to vector<1x16x1xf32>
    tpu.vector_store %arg3[%c0_27, %c0_28, %c0_29], %44 {strides = array<i32>} : memref<1x16x1xf32, #tpu.memory_space<vmem>>, vector<1x16x1xf32>,
    return
  }
  func.func @transform_0(%arg0: i32) -> (i32, i32, i32) {
    %c0_i32 = arith.constant 0 : i32
    %c0_i32_0 = arith.constant 0 : i32
    %c0_i32_1 = arith.constant 0 : i32
    return %arg0, %c0_i32, %c0_i32_0 : i32, i32, i32
  }
  func.func @transform_1(%arg0: i32) -> (i32, i32, i32) {
    %c0_i32 = arith.constant 0 : i32
    %c0_i32_0 = arith.constant 0 : i32
    %c0_i32_1 = arith.constant 0 : i32
    return %arg0, %c0_i32, %c0_i32_0 : i32, i32, i32
  }
  func.func @transform_2(%arg0: i32) -> (i32, i32, i32) {
    %c0_i32 = arith.constant 0 : i32
    %c0_i32_0 = arith.constant 0 : i32
    %c0_i32_1 = arith.constant 0 : i32
    return %arg0, %c0_i32, %c0_i32_0 : i32, i32, i32
  }
}

module attributes {stable_mosaic.version = 11 : i64} {
  func.func @_agg_kernel(%arg0: i32, %arg1: memref<2xi32, #tpu.memory_space<smem>>, %arg2: memref<4xf32, #tpu.memory_space<smem>>, %arg3: memref<1x16x32xf32, #tpu.memory_space<vmem>>, %arg4: memref<1x16x32xf32, #tpu.memory_space<vmem>>, %arg5: memref<32x32xf32, #tpu.memory_space<vmem>>) attributes {dimension_semantics = [#tpu.dimension_semantics<parallel>], iteration_bounds = array<i64: 2>, scalar_prefetch = 1 : i64, scratch_operands = 1 : i64, tpu.core_type = #tpu.core_type<tc>, window_params = [{transform_indices = @transform_0, window_bounds = array<i64: 4>}, {transform_indices = @transform_1, window_bounds = array<i64: 1, 16, 32>}, {transform_indices = @transform_2, window_bounds = array<i64: 1, 16, 32>}]} {
    %c1_i32 = arith.constant 1 : i32
    %0 = arith.muli %arg0, %c1_i32 : i32
    %c0 = arith.constant 0 : index
    %c0_0 = arith.constant 0 : index
    %c0_1 = arith.constant 0 : index
    %1 = vector.load %arg3[%c0, %c0_0, %c0_1] : memref<1x16x32xf32, #tpu.memory_space<vmem>>, vector<1x16x32xf32>
    %2 = vector.shape_cast %1 : vector<1x16x32xf32> to vector<16x32xf32>
    %c0_2 = arith.constant 0 : index
    %c0_3 = arith.constant 0 : index
    %3 = vector.load %arg5[%c0_2, %c0_3] : memref<32x32xf32, #tpu.memory_space<vmem>>, vector<16x32xf32>
    tpu.vector_store %arg5[%c0_2, %c0_3], %2 {strides = array<i32>} : memref<32x32xf32, #tpu.memory_space<vmem>>, vector<16x32xf32>,
    %c16 = arith.constant 16 : index
    %c0_4 = arith.constant 0 : index
    %4 = vector.load %arg5[%c16, %c0_4] : memref<32x32xf32, #tpu.memory_space<vmem>>, vector<16x32xf32>
    tpu.vector_store %arg5[%c16, %c0_4], %2 {strides = array<i32>} : memref<32x32xf32, #tpu.memory_space<vmem>>, vector<16x32xf32>,
    %cst = arith.constant 0.000000e+00 : f32
    %5 = vector.broadcast %cst : f32 to vector<16x32xf32>
    %c0_5 = arith.constant 0 : index
    %6 = memref.load %arg1[%c0_5] : memref<2xi32, #tpu.memory_space<smem>>
    %c0_i32 = arith.constant 0 : i32
    %7 = arith.addi %0, %c0_i32 : i32
    %c2_i32 = arith.constant 2 : i32
    %8 = arith.muli %7, %c2_i32 : i32
    %c0_i32_6 = arith.constant 0 : i32
    %9 = arith.addi %8, %c0_i32_6 : i32
    %10 = arith.index_cast %9 : i32 to index
    %11 = memref.load %arg2[%10] : memref<4xf32, #tpu.memory_space<smem>>
    %c0_i32_7 = arith.constant 0 : i32
    %12 = arith.addi %c0_i32_7, %6 : i32
    %13 = arith.index_cast %12 : i32 to index
    %c0_8 = arith.constant 0 : index
    %14 = vector.load %arg5[%13, %c0_8] : memref<32x32xf32, #tpu.memory_space<vmem>>, vector<16x32xf32>
    %15 = vector.broadcast %11 : f32 to vector<16x32xf32>
    %16 = arith.mulf %14, %15 : vector<16x32xf32>
    %17 = arith.addf %5, %16 : vector<16x32xf32>
    %c1 = arith.constant 1 : index
    %18 = memref.load %arg1[%c1] : memref<2xi32, #tpu.memory_space<smem>>
    %c0_i32_9 = arith.constant 0 : i32
    %19 = arith.addi %0, %c0_i32_9 : i32
    %c2_i32_10 = arith.constant 2 : i32
    %20 = arith.muli %19, %c2_i32_10 : i32
    %c1_i32_11 = arith.constant 1 : i32
    %21 = arith.addi %20, %c1_i32_11 : i32
    %22 = arith.index_cast %21 : i32 to index
    %23 = memref.load %arg2[%22] : memref<4xf32, #tpu.memory_space<smem>>
    %c0_i32_12 = arith.constant 0 : i32
    %24 = arith.addi %c0_i32_12, %18 : i32
    %25 = arith.index_cast %24 : i32 to index
    %c0_13 = arith.constant 0 : index
    %26 = vector.load %arg5[%25, %c0_13] : memref<32x32xf32, #tpu.memory_space<vmem>>, vector<16x32xf32>
    %27 = vector.broadcast %23 : f32 to vector<16x32xf32>
    %28 = arith.mulf %26, %27 : vector<16x32xf32>
    %29 = arith.addf %17, %28 : vector<16x32xf32>
    %c0_14 = arith.constant 0 : index
    %c0_15 = arith.constant 0 : index
    %c0_16 = arith.constant 0 : index
    %30 = vector.load %arg4[%c0_14, %c0_15, %c0_16] : memref<1x16x32xf32, #tpu.memory_space<vmem>>, vector<1x16x32xf32>
    %31 = vector.shape_cast %30 : vector<1x16x32xf32> to vector<16x32xf32>
    %32 = vector.shape_cast %29 : vector<16x32xf32> to vector<1x16x32xf32>
    tpu.vector_store %arg4[%c0_14, %c0_15, %c0_16], %32 {strides = array<i32>} : memref<1x16x32xf32, #tpu.memory_space<vmem>>, vector<1x16x32xf32>,
    return
  }
  func.func @transform_0(%arg0: i32, %arg1: memref<2xi32, #tpu.memory_space<smem>>) -> i32 {
    %c0_i32 = arith.constant 0 : i32
    %c0_i32_0 = arith.constant 0 : i32
    return %c0_i32 : i32
  }
  func.func @transform_1(%arg0: i32, %arg1: memref<2xi32, #tpu.memory_space<smem>>) -> (i32, i32, i32) {
    %c0_i32 = arith.constant 0 : i32
    %c0_i32_0 = arith.constant 0 : i32
    %c0_i32_1 = arith.constant 0 : i32
    return %arg0, %c0_i32, %c0_i32_0 : i32, i32, i32
  }
  func.func @transform_2(%arg0: i32, %arg1: memref<2xi32, #tpu.memory_space<smem>>) -> (i32, i32, i32) {
    %c0_i32 = arith.constant 0 : i32
    %c0_i32_0 = arith.constant 0 : i32
    %c0_i32_1 = arith.constant 0 : i32
    return %arg0, %c0_i32, %c0_i32_0 : i32, i32, i32
  }
}

</mosaic_0001>

<llo_original>
// kernel: autocorrelation_forward.2
$region0: #{autocorrelation_forward.2}
  #allocation0 [shape = 'u32[]', space=smem, size = 0x4, offset = 0x4, fixed_abs, tag = 'smem constant byte address 0x4 - core index']
  #allocation1 [shape = 'u32[144,128]{1,0:T(1,128)}', space=vmem, size = 0x12000, scoped, tag = 'internal scratch']
  #allocation2 [shape = 'f32[32,16]{1,0:T(8,128)}', space=vmem, size = 0x4000, scoped, tag = 'scratch operand']
  %s0 = inlined_call_operand.vmem [shape: f32[2,16,32], index: 0, kind: input, shape index: {}]
  %s1 = inlined_call_operand.vmem [shape: f32[2,16,32], index: 1, kind: input, shape index: {}]
  %s2 = inlined_call_operand.vmem [shape: f32[2,16,1], index: 2, kind: output, shape index: {}]
  %s3 = sld [smem:[#allocation0]]
  $region41: #{autocorrelation_forward.2} parent=0
    _
  %s5 = ssub.s32 1, %s3
  %s6 = scalar_select 0, %s5, %s3
  loop: start=0, step=1, limit=4
  $region2: #{autocorrelation_forward.2} parent=0 // loop_pre_header
    _
  $region3: #{autocorrelation_forward.2} parent=0 // loop_header
    %s8 = sphi 0, %s12
    %p9 = scmp.ge.s32.totalorder %s8, 4
    %s18 = sphi 0, %s20
    %s21 = sphi 0, %s18
    %s22 = sphi 0, %s21
    %s38 = sphi 0, %s22
    %s44 = sphi 0, %s46
    %s47 = sphi 0, %s44
    %s48 = sphi 0, %s47
    %s64 = sphi 0, %s48
    %s70 = sphi 0, %s72
    %s73 = sphi 0, %s70
    %s74 = sphi 0, %s73
    %s90 = sphi 0, %s74
  $region4: #{autocorrelation_forward.2} parent=0 // loop_header_branch
    %11 = sbr.rel (%p9) target = $region8
  $region5: #{autocorrelation_forward.2} parent=0 // loop_body
    %s13 = ssub.s32 %s8, 1
    %s14 = ssub.s32 %s8, 2
    %s15 = sadd.s32 %s8, 1
    %s16 = ssub.s32 %s8, %s15
    %p17 = scmp.eq.s32.totalorder %s16, 0
    %s19 = sadd.s32 %s18, 1
    %s20 = scalar_select %p17, %s18, %s19
    %p23 = pneg %p17
    %p24 = scmp.eq.s32.totalorder %s8, 1
    %p25 = por %p23, %p24
    %p26 = scmp.ne.s32.totalorder %s18, %s21
    %p27 = scmp.eq.s32.totalorder %s8, 0
    %p28 = por %p26, %p27
    %p29 = scmp.ne.s32.totalorder %s18, %s21
    %p30 = scmp.eq.s32.totalorder %s13, 1
    %p31 = por %p29, %p30
    %p32 = scmp.ne.s32.totalorder %s21, %s22
    %p33 = scmp.eq.s32.totalorder %s13, 0
    %p34 = por %p32, %p33
    %p35 = scmp.ne.s32.totalorder %s21, %s22
    %p36 = scmp.eq.s32.totalorder %s14, 1
    %p37 = por %p35, %p36
    %p39 = scmp.ne.s32.totalorder %s22, %s38
    %p40 = scmp.eq.s32.totalorder %s14, 0
    %p41 = por %p39, %p40
    %s42 = ssub.s32 %s8, %s15
    %p43 = scmp.eq.s32.totalorder %s42, 0
    %s45 = sadd.s32 %s44, 1
    %s46 = scalar_select %p43, %s44, %s45
    %p49 = pneg %p43
    %p50 = scmp.eq.s32.totalorder %s8, 1
    %p51 = por %p49, %p50
    %p52 = scmp.ne.s32.totalorder %s44, %s47
    %p53 = scmp.eq.s32.totalorder %s8, 0
    %p54 = por %p52, %p53
    %p55 = scmp.ne.s32.totalorder %s44, %s47
    %p56 = scmp.eq.s32.totalorder %s13, 1
    %p57 = por %p55, %p56
    %p58 = scmp.ne.s32.totalorder %s47, %s48
    %p59 = scmp.eq.s32.totalorder %s13, 0
    %p60 = por %p58, %p59
    %p61 = scmp.ne.s32.totalorder %s47, %s48
    %p62 = scmp.eq.s32.totalorder %s14, 1
    %p63 = por %p61, %p62
    %p65 = scmp.ne.s32.totalorder %s48, %s64
    %p66 = scmp.eq.s32.totalorder %s14, 0
    %p67 = por %p65, %p66
    %s68 = ssub.s32 %s8, %s15
    %p69 = scmp.eq.s32.totalorder %s68, 0
    %s71 = sadd.s32 %s70, 1
    %s72 = scalar_select %p69, %s70, %s71
    %p75 = pneg %p69
    %p76 = scmp.eq.s32.totalorder %s8, 1
    %p77 = por %p75, %p76
    %p78 = scmp.ne.s32.totalorder %s70, %s73
    %p79 = scmp.eq.s32.totalorder %s8, 0
    %p80 = por %p78, %p79
    %p81 = scmp.ne.s32.totalorder %s70, %s73
    %p82 = scmp.eq.s32.totalorder %s13, 1
    %p83 = por %p81, %p82
    %p84 = scmp.ne.s32.totalorder %s73, %s74
    %p85 = scmp.eq.s32.totalorder %s13, 0
    %p86 = por %p84, %p85
    %p87 = scmp.ne.s32.totalorder %s73, %s74
    %p88 = scmp.eq.s32.totalorder %s14, 1
    %p89 = por %p87, %p88
    %p91 = scmp.ne.s32.totalorder %s74, %s90
    %p92 = scmp.eq.s32.totalorder %s14, 0
    %p93 = por %p91, %p92
    %p94 = scmp.le.s32.totalorder 1, %s8
    %p95 = scmp.lt.s32.totalorder %s8, 3
    %p96 = pnand %p94, %p95
    %p97 = pneg %p96
    // Predicated region
    $region9: #{autocorrelation_forward.2} parent=5 // pred_check
      _
    $region10: #{autocorrelation_forward.2} parent=5 // pred_check_branch
      %99 = sbr.rel (%p96) target = $region12
    $region11: #{autocorrelation_forward.2} parent=5 // pred_region
      %s100 = ssub.s32 %s8, 1
    $region12: #{autocorrelation_forward.2} parent=5 // pred_fallthru
      _
    %p101 = scmp.lt.s32.totalorder %s8, 2
    // Predicated region
    $region13: #{autocorrelation_forward.2} parent=5 // pred_check
      %p102 = pneg %p101
    $region14: #{autocorrelation_forward.2} parent=5 // pred_check_branch
      %104 = sbr.rel (%p102) target = $region16
    $region15: #{autocorrelation_forward.2} parent=5 // pred_region
      // Predicated region
      $region17: #{autocorrelation_forward.2} parent=15 // pred_check
        %p105 = pneg %p28
      $region18: #{autocorrelation_forward.2} parent=15 // pred_check_branch
        %107 = sbr.rel (%p105) target = $region20
      $region19: #{autocorrelation_forward.2} parent=15 // pred_region
        %p108 = scmp.lt.s32.totalorder %s8, 1
        %s109 = scalar_select %p108, %s8, 1
        %s110 = smul.addr %s109, 2
        %s111 = smul.addr %s110, 8
        %s112 = scalar_lea.vmem %s0, %s111
      $region20: #{autocorrelation_forward.2} parent=15 // pred_fallthru
        _
      // Predicated region
      $region21: #{autocorrelation_forward.2} parent=15 // pred_check
        %p113 = pneg %p54
      $region22: #{autocorrelation_forward.2} parent=15 // pred_check_branch
        %115 = sbr.rel (%p113) target = $region24
      $region23: #{autocorrelation_forward.2} parent=15 // pred_region
        %p116 = scmp.lt.s32.totalorder %s8, 1
        %s117 = scalar_select %p116, %s8, 1
        %s118 = smul.addr %s117, 2
        %s119 = smul.addr %s118, 8
        %s120 = scalar_lea.vmem %s1, %s119
      $region24: #{autocorrelation_forward.2} parent=15 // pred_fallthru
        _
    $region16: #{autocorrelation_forward.2} parent=5 // pred_fallthru
      _
    %p121 = scmp.le.s32.totalorder 1, %s8
    %p122 = scmp.lt.s32.totalorder %s8, 3
    %p123 = pnand %p121, %p122
    %p124 = pneg %p123
    // Predicated region
    $region25: #{autocorrelation_forward.2} parent=5 // pred_check
      _
    $region26: #{autocorrelation_forward.2} parent=5 // pred_check_branch
      %126 = sbr.rel (%p123) target = $region28
    $region27: #{autocorrelation_forward.2} parent=5 // pred_region
      %s127 = ssub.s32 %s8, 1
      %p128 = scmp.lt.s32.totalorder %s13, 1
      %s129 = scalar_select %p128, %s13, 1
      %s130 = smul.addr %s129, 2
      %s131 = smul.addr %s130, 8
      %s132 = scalar_lea.vmem %s0, %s131
      %p133 = pneg %p34
      %p134 = pneg %p31
      %p135 = scmp.lt.s32.totalorder %s13, 1
      %s136 = scalar_select %p135, %s13, 1
      %s137 = smul.addr %s136, 2
      %s138 = smul.addr %s137, 8
      %s139 = scalar_lea.vmem %s1, %s138
      %p140 = pneg %p60
      %p141 = pneg %p57
      %p142 = pneg %p86
      %p143 = pneg %p83
      %p144 = scmp.lt.s32.totalorder %s13, 1
      %s145 = scalar_select %p144, %s13, 1
      %s146 = smul.addr %s145, 2
      %s147 = smul.addr %s146, 8
      %s148 = scalar_lea.vmem %s2, %s147
      %p149 = scmp.lt.s32.totalorder %s13, 1
      %s150 = scalar_select %p149, %s13, 1
      %s151 = smul.addr %s150, 2
      %s152 = smul.addr %s151, 8
      %s153 = scalar_lea.vmem %s0, %s152
      %p154 = scmp.lt.s32.totalorder %s13, 1
      %s155 = scalar_select %p154, %s13, 1
      %s156 = smul.addr %s155, 2
      %s157 = smul.addr %s156, 8
      %s158 = scalar_lea.vmem %s1, %s157
      %p159 = scmp.lt.s32.totalorder %s13, 1
      %s160 = scalar_select %p159, %s13, 1
      %s161 = smul.addr %s160, 2
      %s162 = smul.addr %s161, 8
      %s163 = scalar_lea.vmem %s2, %s162
      %v164 = vld [vmem:[%s153] sm:$0xff]
      %v165 = vld [vmem:[%s153 + $0x8] sm:$0xff]
      %v166 = vld [vmem:[%s158] sm:$0xff]
      %v167 = vld [vmem:[%s158 + $0x8] sm:$0xff]
      %vm168 = vcmask 261120
      %v170 = vsel %vm168, %v164, 0
      %v173 = vsel %vm168, %v165, 0
      %v176 = vsel %vm168, %v166, 0
      %v179 = vsel %vm168, %v167, 0
      %181 = vmatprep.subr.mxu0 0.0
      %182 = vmatpush1.xpose.msra.mxu0 %v176
      %183 = vmatprep.subr.mxu0 0.0
      %184 = vmatpush1.xpose.msra.mxu0 %v179
      %185 = vmatprep.subr.mxu0 0.0
      %186 = vmatpush1.xpose.msra.mxu0 0.0
      %187 = vmatprep.subr.mxu0 0.0
      %188 = vmatpush1.xpose.msra.mxu0 0.0
      %189 = vmatprep.subr.mxu0 0.0
      %190 = vmatpush1.xpose.msra.mxu0 0.0
      %191 = vmatprep.subr.mxu0 0.0
      %192 = vmatpush1.xpose.msra.mxu0 0.0
      %193 = vmatprep.subr.mxu0 0.0
      %194 = vmatpush1.xpose.msra.mxu0 0.0
      %195 = vmatprep.subr.mxu0 0.0
      %196 = vmatpush1.xpose.msra.mxu0 0.0
      %197 = vmatprep.subr.mxu0 0.0
      %198 = vmatpush1.xpose.msra.mxu0 0.0
      %199 = vmatprep.subr.mxu0 0.0
      %200 = vmatpush1.xpose.msra.mxu0 0.0
      %201 = vmatprep.subr.mxu0 0.0
      %202 = vmatpush1.xpose.msra.mxu0 0.0
      %203 = vmatprep.subr.mxu0 0.0
      %204 = vmatpush1.xpose.msra.mxu0 0.0
      %205 = vmatprep.subr.mxu0 0.0
      %206 = vmatpush1.xpose.msra.mxu0 0.0
      %207 = vmatprep.subr.mxu0 0.0
      %208 = vmatpush1.xpose.msra.mxu0 0.0
      %209 = vmatprep.subr.mxu0 0.0
      %210 = vmatpush1.xpose.msra.mxu0 0.0
      %211 = vmatprep.subr.mxu0 0.0
      %212 = vmatpush1.xpose.msra.mxu0 0.0
      %213 = vmatprep.subr.mxu0 0.0
      %214 = vmatpush1.xpose.msra.mxu0 0.0
      %215 = vmatprep.subr.mxu0 0.0
      %216 = vmatpush1.xpose.msra.mxu0 0.0
      %217 = vmatprep.subr.mxu0 0.0
      %218 = vmatpush1.xpose.msra.mxu0 0.0
      %219 = vmatprep.subr.mxu0 0.0
      %220 = vmatpush1.xpose.msra.mxu0 0.0
      %221 = vmatprep.subr.mxu0 0.0
      %222 = vmatpush1.xpose.msra.mxu0 0.0
      %223 = vmatprep.subr.mxu0 0.0
      %224 = vmatpush1.xpose.msra.mxu0 0.0
      %225 = vmatprep.subr.mxu0 0.0
      %226 = vmatpush1.xpose.msra.mxu0 0.0
      %227 = vmatprep.subr.mxu0 0.0
      %228 = vmatpush1.xpose.msra.mxu0 0.0
      %229 = vmatprep.subr.mxu0 0.0
      %230 = vmatpush1.xpose.msra.mxu0 0.0
      %231 = vmatprep.subr.mxu0 0.0
      %232 = vmatpush1.xpose.msra.mxu0 0.0
      %233 = vmatprep.subr.mxu0 0.0
      %234 = vmatpush1.xpose.msra.mxu0 0.0
      %235 = vmatprep.subr.mxu0 0.0
      %236 = vmatpush1.xpose.msra.mxu0 0.0
      %237 = vmatprep.subr.mxu0 0.0
      %238 = vmatpush1.xpose.msra.mxu0 0.0
      %239 = vmatprep.subr.mxu0 0.0
      %240 = vmatpush1.xpose.msra.mxu0 0.0
      %241 = vmatprep.subr.mxu0 0.0
      %242 = vmatpush1.xpose.msra.mxu0 0.0
      %243 = vmatprep.subr.mxu0 0.0
      %244 = vmatpush1.xpose.msra.mxu0 0.0
      %245 = vmatprep.mubr.f32.mxu0 0.0
      %246 = vmatmul.mubr.f32.gmra.mrb[0].mxu0 %v170
      %v247 = vpop.f32.mrb[0].mxu0
      %v248 = vadd.f32 0.0, %v247
      %v249 = vpop.f32.mrb[0].mxu0
      %250 = vmatprep.mubr.f32.mxu0 0.0
      %251 = vmatmul.mubr.f32.gmra.mrb[0].mxu0 %v173
      %v252 = vpop.f32.mrb[0].mxu0
      %v253 = vadd.f32 0.0, %v252
      %v254 = vpop.f32.mrb[0].mxu0
      %255 = vdwg.mxu0
      %vm256 = vcmask 130048
      %257 = vst.msk [vmem:[#allocation2] sm:$0xff] %vm256, %v248
      %258 = vst.msk [vmem:[#allocation2 + $0x8] sm:$0xff] %vm256, %v253
      %259 = vst.msk [vmem:[#allocation2 + $0x10] sm:$0xff] %vm256, %v248
      %260 = vst.msk [vmem:[#allocation2 + $0x18] sm:$0xff] %vm256, %v253
      %v261 = vld [vmem:[#allocation2] sm:$0xff]
      %v262 = vld [vmem:[#allocation2 + $0x8] sm:$0xff]
      %v263 = vadd.f32 %v261, 0.0
      %v264 = vadd.f32 %v262, 0.0
      %v265 = vld [vmem:[#allocation2 + $0x1] sm:$0xff]
      %v266 = vld [vmem:[#allocation2 + $0x9] sm:$0xff]
      %269 = vrot.lane.b32.xlu0 %v265, 127
      %v270 = vpop.permute.xlu0 %269
      %271 = vrot.lane.b32.xlu0 %v266, 127
      %v272 = vpop.permute.xlu0 %271
      %v275 = vadd.f32 %v263, %v270
      %v276 = vadd.f32 %v264, %v272
      %v277 = vld [vmem:[#allocation2 + $0x2] sm:$0xff]
      %v278 = vld [vmem:[#allocation2 + $0xa] sm:$0xff]
      %281 = vrot.lane.b32.xlu0 %v277, 126
      %v282 = vpop.permute.xlu0 %281
      %283 = vrot.lane.b32.xlu0 %v278, 126
      %v284 = vpop.permute.xlu0 %283
      %v287 = vadd.f32 %v275, %v282
      %v288 = vadd.f32 %v276, %v284
      %v289 = vld [vmem:[#allocation2 + $0x3] sm:$0xff]
      %v290 = vld [vmem:[#allocation2 + $0xb] sm:$0xff]
      %293 = vrot.lane.b32.xlu0 %v289, 125
      %v294 = vpop.permute.xlu0 %293
      %295 = vrot.lane.b32.xlu0 %v290, 125
      %v296 = vpop.permute.xlu0 %295
      %v299 = vadd.f32 %v287, %v294
      %v300 = vadd.f32 %v288, %v296
      %v301 = vld [vmem:[#allocation2 + $0x4] sm:$0xff]
      %v302 = vld [vmem:[#allocation2 + $0xc] sm:$0xff]
      %305 = vrot.lane.b32.xlu0 %v301, 124
      %v306 = vpop.permute.xlu0 %305
      %307 = vrot.lane.b32.xlu0 %v302, 124
      %v308 = vpop.permute.xlu0 %307
      %v311 = vadd.f32 %v299, %v306
      %v312 = vadd.f32 %v300, %v308
      %v313 = vld [vmem:[#allocation2 + $0x5] sm:$0xff]
      %v314 = vld [vmem:[#allocation2 + $0xd] sm:$0xff]
      %317 = vrot.lane.b32.xlu0 %v313, 123
      %v318 = vpop.permute.xlu0 %317
      %319 = vrot.lane.b32.xlu0 %v314, 123
      %v320 = vpop.permute.xlu0 %319
      %v323 = vadd.f32 %v311, %v318
      %v324 = vadd.f32 %v312, %v320
      %v325 = vld [vmem:[#allocation2 + $0x6] sm:$0xff]
      %v326 = vld [vmem:[#allocation2 + $0xe] sm:$0xff]
      %329 = vrot.lane.b32.xlu0 %v325, 122
      %v330 = vpop.permute.xlu0 %329
      %331 = vrot.lane.b32.xlu0 %v326, 122
      %v332 = vpop.permute.xlu0 %331
      %v335 = vadd.f32 %v323, %v330
      %v336 = vadd.f32 %v324, %v332
      %v337 = vld [vmem:[#allocation2 + $0x7] sm:$0xff]
      %v338 = vld [vmem:[#allocation2 + $0xf] sm:$0xff]
      %341 = vrot.lane.b32.xlu0 %v337, 121
      %v342 = vpop.permute.xlu0 %341
      %343 = vrot.lane.b32.xlu0 %v338, 121
      %v344 = vpop.permute.xlu0 %343
      %v347 = vadd.f32 %v335, %v342
      %v348 = vadd.f32 %v336, %v344
      %v349 = vld [vmem:[#allocation2 + $0x10] sm:$0xff]
      %352 = vrot.lane.b32.xlu0 %v262, 120
      %v353 = vpop.permute.xlu0 %352
      %354 = vrot.lane.b32.xlu0 %v349, 120
      %v355 = vpop.permute.xlu0 %354
      %v358 = vadd.f32 %v347, %v353
      %v359 = vadd.f32 %v348, %v355
      %v360 = vld [vmem:[#allocation2 + $0x11] sm:$0xff]
      %362 = vrot.lane.b32.xlu0 %v266, 119
      %v363 = vpop.permute.xlu0 %362
      %364 = vrot.lane.b32.xlu0 %v360, 119
      %v365 = vpop.permute.xlu0 %364
      %v368 = vadd.f32 %v358, %v363
      %v369 = vadd.f32 %v359, %v365
      %v370 = vld [vmem:[#allocation2 + $0x12] sm:$0xff]
      %372 = vrot.lane.b32.xlu0 %v278, 118
      %v373 = vpop.permute.xlu0 %372
      %374 = vrot.lane.b32.xlu0 %v370, 118
      %v375 = vpop.permute.xlu0 %374
      %v378 = vadd.f32 %v368, %v373
      %v379 = vadd.f32 %v369, %v375
      %v380 = vld [vmem:[#allocation2 + $0x13] sm:$0xff]
      %382 = vrot.lane.b32.xlu0 %v290, 117
      %v383 = vpop.permute.xlu0 %382
      %384 = vrot.lane.b32.xlu0 %v380, 117
      %v385 = vpop.permute.xlu0 %384
      %v388 = vadd.f32 %v378, %v383
      %v389 = vadd.f32 %v379, %v385
      %v390 = vld [vmem:[#allocation2 + $0x14] sm:$0xff]
      %392 = vrot.lane.b32.xlu0 %v302, 116
      %v393 = vpop.permute.xlu0 %392
      %394 = vrot.lane.b32.xlu0 %v390, 116
      %v395 = vpop.permute.xlu0 %394
      %v398 = vadd.f32 %v388, %v393
      %v399 = vadd.f32 %v389, %v395
      %v400 = vld [vmem:[#allocation2 + $0x15] sm:$0xff]
      %402 = vrot.lane.b32.xlu0 %v314, 115
      %v403 = vpop.permute.xlu0 %402
      %404 = vrot.lane.b32.xlu0 %v400, 115
      %v405 = vpop.permute.xlu0 %404
      %v408 = vadd.f32 %v398, %v403
      %v409 = vadd.f32 %v399, %v405
      %v410 = vld [vmem:[#allocation2 + $0x16] sm:$0xff]
      %412 = vrot.lane.b32.xlu0 %v326, 114
      %v413 = vpop.permute.xlu0 %412
      %414 = vrot.lane.b32.xlu0 %v410, 114
      %v415 = vpop.permute.xlu0 %414
      %v418 = vadd.f32 %v408, %v413
      %v419 = vadd.f32 %v409, %v415
      %v420 = vld [vmem:[#allocation2 + $0x17] sm:$0xff]
      %422 = vrot.lane.b32.xlu0 %v338, 113
      %v423 = vpop.permute.xlu0 %422
      %424 = vrot.lane.b32.xlu0 %v420, 113
      %v425 = vpop.permute.xlu0 %424
      %v428 = vadd.f32 %v418, %v423
      %v429 = vadd.f32 %v419, %v425
      %v430 = vmul.f32 %v428, 0.03125
      %v431 = vmul.f32 %v429, 0.03125
      %vm432 = vcmask 7168
      %433 = vst.msk [vmem:[%s163] sm:$0xff] %vm432, %v430
      %434 = vst.msk [vmem:[%s163 + $0x8] sm:$0xff] %vm432, %v431
      %p435 = scmp.lt.s32.totalorder %s13, 1
      %s436 = scalar_select %p435, %s13, 1
      %s437 = smul.addr %s436, 2
      %s438 = smul.addr %s437, 8
      %s439 = scalar_lea.vmem %s2, %s438
      // Predicated region
      $region29: #{autocorrelation_forward.2} parent=27 // pred_check
        %p440 = pneg %p83
      $region30: #{autocorrelation_forward.2} parent=27 // pred_check_branch
        %442 = sbr.rel (%p440) target = $region32
      $region31: #{autocorrelation_forward.2} parent=27 // pred_region
        _
      $region32: #{autocorrelation_forward.2} parent=27 // pred_fallthru
        _
    $region28: #{autocorrelation_forward.2} parent=5 // pred_fallthru
      _
    %p443 = scmp.le.s32.totalorder 2, %s8
    // Predicated region
    $region33: #{autocorrelation_forward.2} parent=5 // pred_check
      %p444 = pneg %p443
    $region34: #{autocorrelation_forward.2} parent=5 // pred_check_branch
      %446 = sbr.rel (%p444) target = $region36
    $region35: #{autocorrelation_forward.2} parent=5 // pred_region
      %s447 = ssub.s32 %s8, 2
      // Predicated region
      $region37: #{autocorrelation_forward.2} parent=35 // pred_check
        %p448 = pneg %p89
      $region38: #{autocorrelation_forward.2} parent=35 // pred_check_branch
        %450 = sbr.rel (%p448) target = $region40
      $region39: #{autocorrelation_forward.2} parent=35 // pred_region
        %p451 = scmp.lt.s32.totalorder %s14, 1
        %s452 = scalar_select %p451, %s14, 1
        %s453 = smul.addr %s452, 2
        %s454 = smul.addr %s453, 8
        %s455 = scalar_lea.vmem %s2, %s454
      $region40: #{autocorrelation_forward.2} parent=35 // pred_fallthru
        _
    $region36: #{autocorrelation_forward.2} parent=5 // pred_fallthru
      _
  $region6: #{autocorrelation_forward.2} parent=0 // loop_footer
    %s12 = sadd.s32 1, %s8
  $region7: #{autocorrelation_forward.2} parent=0 // loop_footer_branch
    %7 = sbr.rel target = $region3
  $region8: #{autocorrelation_forward.2} parent=0 // loop_exit
    _

// kernel: autocorrelation_forward.3
$region0: #{autocorrelation_forward.3}
  #allocation0 [shape = 'u32[]', space=smem, size = 0x4, offset = 0x4, fixed_abs, tag = 'smem constant byte address 0x4 - core index']
  #allocation1 [shape = 'u32[144,128]{1,0:T(1,128)}', space=vmem, size = 0x12000, scoped, tag = 'internal scratch']
  #allocation2 [shape = 'f32[32,32]{1,0:T(8,128)}', space=vmem, size = 0x4000, scoped, tag = 'scratch operand']
  #allocation3 [shape = 's32[1]{0}', space=sflag, size = 0x4, scoped, tag = 'scoped memory for autocorrelation_forward.3']
  #allocation4 [shape = 'u8[512]{0}', space=smem, size = 0x200, scoped, tag = 'prefetched SMEM operand 0']
  %s0 = inlined_call_operand.vmem [shape: s32[2], index: 0, kind: input, shape index: {}]
  %s1 = inlined_call_operand.vmem [shape: f32[4], index: 1, kind: input, shape index: {}]
  %s2 = inlined_call_operand.vmem [shape: f32[2,16,32], index: 2, kind: input, shape index: {}]
  %s3 = inlined_call_operand.vmem [shape: f32[2,16,32], index: 3, kind: output, shape index: {}]
  %s4 = sld [smem:[#allocation0]]
  $region45: #{autocorrelation_forward.3} parent=0
    _
  %s6 = ssub.s32 1, %s4
  %s7 = scalar_select 0, %s6, %s4
  %s8 = sshll.u32 %s0, 4
  %s9 = int_to_ptr.vmem [resolvable:$true] %s8
  %11 = dma.vmem_to_smem %s9, 16, [#allocation4], [#allocation3]
  %12 = dma.done [#allocation3], 16
  %13 = sfence
  $region1: #{autocorrelation_forward.3} parent=0
    #allocation5 [shape = 'u8[512]{0}', space=smem, size = 0x200, scoped, tag = 'input window, operand 1, single buffered']
    #allocation6 [shape = 's32[2]{0}', space=sflag, size = 0x8, scoped, tag = 'scoped memory for autocorrelation_forward.3']
    %14 = vsyncpa [#allocation6], 0
    loop: start=0, step=1, limit=4
    $region2: #{autocorrelation_forward.3} parent=1 // loop_pre_header
      _
    $region3: #{autocorrelation_forward.3} parent=1 // loop_header
      %s16 = sphi 0, %s20
      %p17 = scmp.ge.s32.totalorder %s16, 4
      %s24 = sphi 0, %s24
      %s26 = sphi 0, %s24
      %s27 = sphi 0, %s26
      %s41 = sphi 0, %s27
      %s47 = sphi 0, %s49
      %s50 = sphi 0, %s47
      %s51 = sphi 0, %s50
      %s67 = sphi 0, %s51
      %s73 = sphi 0, %s75
      %s76 = sphi 0, %s73
      %s77 = sphi 0, %s76
      %s93 = sphi 0, %s77
    $region4: #{autocorrelation_forward.3} parent=1 // loop_header_branch
      %19 = sbr.rel (%p17) target = $region8
    $region5: #{autocorrelation_forward.3} parent=1 // loop_body
      %s21 = ssub.s32 %s16, 1
      %s22 = ssub.s32 %s16, 2
      %s23 = sadd.s32 %s16, 1
      %s25 = sadd.s32 %s24, 1
      %p28 = scmp.eq.s32.totalorder %s16, 1
      %p29 = scmp.ne.s32.totalorder %s24, %s26
      %p30 = scmp.eq.s32.totalorder %s16, 0
      %p31 = por %p29, %p30
      %p32 = scmp.ne.s32.totalorder %s24, %s26
      %p33 = scmp.eq.s32.totalorder %s21, 1
      %p34 = por %p32, %p33
      %p35 = scmp.ne.s32.totalorder %s26, %s27
      %p36 = scmp.eq.s32.totalorder %s21, 0
      %p37 = por %p35, %p36
      %p38 = scmp.ne.s32.totalorder %s26, %s27
      %p39 = scmp.eq.s32.totalorder %s22, 1
      %p40 = por %p38, %p39
      %p42 = scmp.ne.s32.totalorder %s27, %s41
      %p43 = scmp.eq.s32.totalorder %s22, 0
      %p44 = por %p42, %p43
      %s45 = ssub.s32 %s16, %s23
      %p46 = scmp.eq.s32.totalorder %s45, 0
      %s48 = sadd.s32 %s47, 1
      %s49 = scalar_select %p46, %s47, %s48
      %p52 = pneg %p46
      %p53 = scmp.eq.s32.totalorder %s16, 1
      %p54 = por %p52, %p53
      %p55 = scmp.ne.s32.totalorder %s47, %s50
      %p56 = scmp.eq.s32.totalorder %s16, 0
      %p57 = por %p55, %p56
      %p58 = scmp.ne.s32.totalorder %s47, %s50
      %p59 = scmp.eq.s32.totalorder %s21, 1
      %p60 = por %p58, %p59
      %p61 = scmp.ne.s32.totalorder %s50, %s51
      %p62 = scmp.eq.s32.totalorder %s21, 0
      %p63 = por %p61, %p62
      %p64 = scmp.ne.s32.totalorder %s50, %s51
      %p65 = scmp.eq.s32.totalorder %s22, 1
      %p66 = por %p64, %p65
      %p68 = scmp.ne.s32.totalorder %s51, %s67
      %p69 = scmp.eq.s32.totalorder %s22, 0
      %p70 = por %p68, %p69
      %s71 = ssub.s32 %s16, %s23
      %p72 = scmp.eq.s32.totalorder %s71, 0
      %s74 = sadd.s32 %s73, 1
      %s75 = scalar_select %p72, %s73, %s74
      %p78 = pneg %p72
      %p79 = scmp.eq.s32.totalorder %s16, 1
      %p80 = por %p78, %p79
      %p81 = scmp.ne.s32.totalorder %s73, %s76
      %p82 = scmp.eq.s32.totalorder %s16, 0
      %p83 = por %p81, %p82
      %p84 = scmp.ne.s32.totalorder %s73, %s76
      %p85 = scmp.eq.s32.totalorder %s21, 1
      %p86 = por %p84, %p85
      %p87 = scmp.ne.s32.totalorder %s76, %s77
      %p88 = scmp.eq.s32.totalorder %s21, 0
      %p89 = por %p87, %p88
      %p90 = scmp.ne.s32.totalorder %s76, %s77
      %p91 = scmp.eq.s32.totalorder %s22, 1
      %p92 = por %p90, %p91
      %p94 = scmp.ne.s32.totalorder %s77, %s93
      %p95 = scmp.eq.s32.totalorder %s22, 0
      %p96 = por %p94, %p95
      %p97 = scmp.le.s32.totalorder 1, %s16
      %p98 = scmp.lt.s32.totalorder %s16, 3
      %p99 = pnand %p97, %p98
      %p100 = pneg %p99
      // Predicated region
      $region9: #{autocorrelation_forward.3} parent=5 // pred_check
        _
      $region10: #{autocorrelation_forward.3} parent=5 // pred_check_branch
        %102 = sbr.rel (%p99) target = $region12
      $region11: #{autocorrelation_forward.3} parent=5 // pred_region
        %s103 = ssub.s32 %s16, 1
        // Predicated region
        $region13: #{autocorrelation_forward.3} parent=11 // pred_check
          %p104 = pneg %p37
        $region14: #{autocorrelation_forward.3} parent=11 // pred_check_branch
          %106 = sbr.rel (%p104) target = $region16
        $region15: #{autocorrelation_forward.3} parent=11 // pred_region
          %s108 = ssub.s32 16, 16
          %109 = vsyncadd [#allocation6], %s108
          %s111 = sshll.u32 %s1, 4
          %s112 = int_to_ptr.vmem [resolvable:$true] %s111
          %114 = dma.vmem_to_smem %s112, 16, [#allocation5], [#allocation6]
        $region16: #{autocorrelation_forward.3} parent=11 // pred_fallthru
          _
      $region12: #{autocorrelation_forward.3} parent=5 // pred_fallthru
        _
      %p115 = scmp.lt.s32.totalorder %s16, 2
      // Predicated region
      $region17: #{autocorrelation_forward.3} parent=5 // pred_check
        %p116 = pneg %p115
      $region18: #{autocorrelation_forward.3} parent=5 // pred_check_branch
        %118 = sbr.rel (%p116) target = $region20
      $region19: #{autocorrelation_forward.3} parent=5 // pred_region
        // Predicated region
        $region21: #{autocorrelation_forward.3} parent=19 // pred_check
          %p119 = pneg %p57
        $region22: #{autocorrelation_forward.3} parent=19 // pred_check_branch
          %121 = sbr.rel (%p119) target = $region24
        $region23: #{autocorrelation_forward.3} parent=19 // pred_region
          %p122 = scmp.lt.s32.totalorder %s16, 1
          %s123 = scalar_select %p122, %s16, 1
          %s124 = smul.addr %s123, 2
          %s125 = smul.addr %s124, 8
          %s126 = scalar_lea.vmem %s2, %s125
        $region24: #{autocorrelation_forward.3} parent=19 // pred_fallthru
          _
      $region20: #{autocorrelation_forward.3} parent=5 // pred_fallthru
        _
      %p127 = scmp.le.s32.totalorder 1, %s16
      %p128 = scmp.lt.s32.totalorder %s16, 3
      %p129 = pnand %p127, %p128
      %p130 = pneg %p129
      // Predicated region
      $region25: #{autocorrelation_forward.3} parent=5 // pred_check
        _
      $region26: #{autocorrelation_forward.3} parent=5 // pred_check_branch
        %132 = sbr.rel (%p129) target = $region28
      $region27: #{autocorrelation_forward.3} parent=5 // pred_region
        %s133 = ssub.s32 %s16, 1
        // Predicated region
        $region29: #{autocorrelation_forward.3} parent=27 // pred_check
          %p134 = pneg %p37
        $region30: #{autocorrelation_forward.3} parent=27 // pred_check_branch
          %136 = sbr.rel (%p134) target = $region32
        $region31: #{autocorrelation_forward.3} parent=27 // pred_region
          %137 = dma.done [#allocation6], 16
        $region32: #{autocorrelation_forward.3} parent=27 // pred_fallthru
          _
        %138 = sfence
        %p139 = pneg %p37
        %p140 = pneg %p34
        %p141 = scmp.lt.s32.totalorder %s21, 1
        %s142 = scalar_select %p141, %s21, 1
        %s143 = smul.addr %s142, 2
        %s144 = smul.addr %s143, 8
        %s145 = scalar_lea.vmem %s2, %s144
        %p146 = pneg %p63
        %p147 = pneg %p60
        %p148 = pneg %p89
        %p149 = pneg %p86
        %p150 = scmp.lt.s32.totalorder %s21, 1
        %s151 = scalar_select %p150, %s21, 1
        %s152 = smul.addr %s151, 2
        %s153 = smul.addr %s152, 8
        %s154 = scalar_lea.vmem %s3, %s153
        %p155 = scmp.lt.s32.totalorder %s21, 1
        %s156 = scalar_select %p155, %s21, 1
        %s157 = smul.addr %s156, 2
        %s158 = smul.addr %s157, 8
        %s159 = scalar_lea.vmem %s2, %s158
        %p160 = scmp.lt.s32.totalorder %s21, 1
        %s161 = scalar_select %p160, %s21, 1
        %s162 = smul.addr %s161, 2
        %s163 = smul.addr %s162, 8
        %s164 = scalar_lea.vmem %s3, %s163
        %v165 = vld [vmem:[%s159] sm:$0xff]
        %v166 = vld [vmem:[%s159 + $0x8] sm:$0xff]
        %vm167 = vcmask 261120
        %168 = vst.msk [vmem:[#allocation2] sm:$0xff] %vm167, %v165
        %169 = vst.msk [vmem:[#allocation2 + $0x8] sm:$0xff] %vm167, %v166
        %170 = vst.msk [vmem:[#allocation2 + $0x10] sm:$0xff] %vm167, %v165
        %171 = vst.msk [vmem:[#allocation2 + $0x18] sm:$0xff] %vm167, %v166
        %s172 = sld [smem:[#allocation4]]
        %s173 = smul.u32 %s21, 2
        %s174 = sld [smem:[#allocation5 + %s173]]
        %s175 = scalar_lea.vmem [#allocation2], %s172
        %v176 = vld [vmem:[%s175] sm:$0xff]
        %v177 = vld [vmem:[%s175 + $0x8] sm:$0xff]
        %v178 = vstv %s174
        %v179 = vmul.f32 %v176, %v178
        %v180 = vmul.f32 %v177, %v178
        %v181 = vadd.f32 %v179, 0.0
        %v182 = vadd.f32 %v180, 0.0
        %s183 = sld [smem:[#allocation4 + $0x1]]
        %s184 = sadd.s32 %s173, 1
        %s185 = sld [smem:[#allocation5 + %s184]]
        %s186 = scalar_lea.vmem [#allocation2], %s183
        %v187 = vld [vmem:[%s186] sm:$0xff]
        %v188 = vld [vmem:[%s186 + $0x8] sm:$0xff]
        %v189 = vstv %s185
        %v190 = vmul.f32 %v187, %v189
        %v191 = vmul.f32 %v188, %v189
        %v192 = vadd.f32 %v181, %v190
        %v193 = vadd.f32 %v182, %v191
        %194 = vst.msk [vmem:[%s164] sm:$0xff] %vm167, %v192
        %195 = vst.msk [vmem:[%s164 + $0x8] sm:$0xff] %vm167, %v193
        %p196 = scmp.lt.s32.totalorder %s21, 1
        %s197 = scalar_select %p196, %s21, 1
        %s198 = smul.addr %s197, 2
        %s199 = smul.addr %s198, 8
        %s200 = scalar_lea.vmem %s3, %s199
        // Predicated region
        $region33: #{autocorrelation_forward.3} parent=27 // pred_check
          %p201 = pneg %p86
        $region34: #{autocorrelation_forward.3} parent=27 // pred_check_branch
          %203 = sbr.rel (%p201) target = $region36
        $region35: #{autocorrelation_forward.3} parent=27 // pred_region
          _
        $region36: #{autocorrelation_forward.3} parent=27 // pred_fallthru
          _
      $region28: #{autocorrelation_forward.3} parent=5 // pred_fallthru
        _
      %p204 = scmp.le.s32.totalorder 2, %s16
      // Predicated region
      $region37: #{autocorrelation_forward.3} parent=5 // pred_check
        %p205 = pneg %p204
      $region38: #{autocorrelation_forward.3} parent=5 // pred_check_branch
        %207 = sbr.rel (%p205) target = $region40
      $region39: #{autocorrelation_forward.3} parent=5 // pred_region
        %s208 = ssub.s32 %s16, 2
        // Predicated region
        $region41: #{autocorrelation_forward.3} parent=39 // pred_check
          %p209 = pneg %p92
        $region42: #{autocorrelation_forward.3} parent=39 // pred_check_branch
          %211 = sbr.rel (%p209) target = $region44
        $region43: #{autocorrelation_forward.3} parent=39 // pred_region
          %p212 = scmp.lt.s32.totalorder %s22, 1
          %s213 = scalar_select %p212, %s22, 1
          %s214 = smul.addr %s213, 2
          %s215 = smul.addr %s214, 8
          %s216 = scalar_lea.vmem %s3, %s215
        $region44: #{autocorrelation_forward.3} parent=39 // pred_fallthru
          _
      $region40: #{autocorrelation_forward.3} parent=5 // pred_fallthru
        _
    $region6: #{autocorrelation_forward.3} parent=1 // loop_footer
      %s20 = sadd.s32 1, %s16
    $region7: #{autocorrelation_forward.3} parent=1 // loop_footer_branch
      %15 = sbr.rel target = $region3
    $region8: #{autocorrelation_forward.3} parent=1 // loop_exit
      _
    %217 = vsyncpa [#allocation6], 1
    %s218 = scalar_lea.sflag [#allocation6], 1
    %219 = vsyncpa %s218, 1

</llo_original>
